<compile_context>
chip_gen: v7x
topology: tpu7x:2x2x1
jax: 0.10.0
libtpu: 0.0.40
codegen_flags: <defaults>
</compile_context>

<pallas_src>
import jax
import jax.numpy as jnp
from jax.experimental import pallas as pl
from jax.experimental.pallas import tpu as pltpu


# ----------------------------- fused kernel -----------------------------------


def _stem_kernel(p_ref, w_ref, s_ref, b_ref, o_ref, wsh_ref, hsh_ref):
    # p_ref : (2, 2, TP*Wm, K) bf16  patch rows, dims = (row parity, col parity,
    #         flattened (pool-row, pool-col), im2col features)
    # w_ref : (K, Cout) bf16 flattened conv1 weight
    # s_ref, b_ref : (1, Cout) f32 folded BatchNorm scale / bias
    # o_ref : (TP*Wm, Cout) f32 pooled output rows
    # wsh_ref: (1 + TP*Wm, Cout) f32 scratch for the 1-row (prev pool-col) shift
    # hsh_ref: (Wm + TP*Wm, Cout) f32 scratch for the Wm-row (prev pool-row)
    #          shift; rows [0, Wm) persist across grid steps as the halo carry.
    t = pl.program_id(1)
    nrows = p_ref.shape[2]            # TP * Wm
    cout = o_ref.shape[-1]
    wm = hsh_ref.shape[0] - nrows     # Wm

    w = w_ref[...]
    scale = s_ref[...]
    bias = b_ref[...]

    @pl.when(t == 0)
    def _():
        # top-of-image pool halo: zero is exact because the ReLU output >= 0
        hsh_ref[pl.ds(0, wm), :] = jnp.zeros((wm, cout), jnp.float32)
        wsh_ref[pl.ds(0, 1), :] = jnp.zeros((1, cout), jnp.float32)

    # rows whose pool-col index is 0 (left pad column of the pool window)
    j0 = (jax.lax.broadcasted_iota(jnp.int32, (nrows, 1), 0) % wm) == 0

    def conv_bn_relu(rp, cp):
        acc = jnp.dot(p_ref[rp, cp], w, preferred_element_type=jnp.float32)
        return jnp.maximum(acc * scale + bias, 0.0)        # f32 epilogue

    def row_group_wmax(rp):
        # max over conv cols {2j, 2j+1, 2j-1} for every conv row of parity rp
        even_col = conv_bn_relu(rp, 0)                      # conv col 2j
        odd_col = conv_bn_relu(rp, 1)                       # conv col 2j+1
        wsh_ref[pl.ds(1, nrows), :] = odd_col
        prev_odd = jnp.where(j0, 0.0, wsh_ref[pl.ds(0, nrows), :])  # col 2j-1
        return jnp.maximum(jnp.maximum(even_col, odd_col), prev_odd)

    wmax_even = row_group_wmax(0)     # conv rows 2i   (W-maxed)
    wmax_odd = row_group_wmax(1)      # conv rows 2i+1 (W-maxed)

    # max over conv rows {2i, 2i+1, 2i-1}; rows 2i-1 come from the previous
    # pool row (halo carried in hsh_ref[0:Wm]).
    hsh_ref[pl.ds(wm, nrows), :] = wmax_odd
    prev_odd_rows = hsh_ref[pl.ds(0, nrows), :]
    o_ref[...] = jnp.maximum(jnp.maximum(wmax_even, wmax_odd),
                             prev_odd_rows).astype(o_ref.dtype)

    # carry the last pool row's W-maxed odd conv row into the next grid step
    hsh_ref[pl.ds(0, wm), :] = hsh_ref[pl.ds(nrows, wm), :]


# ----------------------------- helpers -----------------------------------------


def _pick_pool_row_tile(hm, target=16):
    """Pool-row tile: whole image if small, else the largest multiple of 8
    <= target that divides hm (keeps output-block sublanes aligned), else hm."""
    if hm <= 8:
        return hm
    best = None
    tp = 8
    while tp <= min(hm, target):
        if hm % tp == 0:
            best = tp
        tp += 8
    return best if best is not None else hm


# ----------------------------- wrapper ------------------------------------------


def thermal_moduleA_forward(x_nchw, conv_w, bn_gamma, bn_beta, bn_mean, bn_var,
                            eps=1e-5):
    """Pallas implementation of conv1 -> bn1 -> relu -> maxpool (ResNet-50 stem)."""
    N, C, H, W = x_nchw.shape
    KH = KW = 7
    stride = 2
    pad = 3
    Cout = conv_w.shape[0]

    Ho = (H + 2 * pad - KH) // stride + 1
    Wo = (W + 2 * pad - KW) // stride + 1
    assert Ho % 2 == 0 and Wo % 2 == 0, (
        "fused stem expects even conv1 output H/W (e.g. 224x224 or 16x16 inputs)")
    Hm, Wm = Ho // 2, Wo // 2
    K = KH * KW * C

    # ---- layout glue (XLA): NCHW -> NHWC bf16, pad, im2col with rows ordered
    #      as (row parity, col parity, pool-row, pool-col) so the fused pool
    #      needs only element-wise maxes and two static shifts ----
    x = jnp.transpose(x_nchw, (0, 2, 3, 1)).astype(jnp.bfloat16)
    x_pad = jnp.pad(x, ((0, 0), (pad, pad), (pad, pad), (0, 0)))
    cols = []
    for kh in range(KH):
        for kw in range(KW):
            cols.append(x_pad[:, kh:kh + stride * Ho:stride,
                              kw:kw + stride * Wo:stride, :])
    patches = jnp.stack(cols, axis=3).reshape(N, Ho, Wo, K)
    patches = patches.reshape(N, Hm, 2, Wm, 2, K)        # ho=(hp,rp), wo=(j,cp)
    patches = patches.transpose(0, 2, 4, 1, 3, 5)        # (N, rp, cp, hp, j, K)
    patches = patches.reshape(N, 2, 2, Hm * Wm, K)

    # conv weight (Cout, Cin, KH, KW) -> (KH*KW*Cin, Cout), feature order [kh,kw,c]
    w2d = jnp.transpose(conv_w, (2, 3, 1, 0)).reshape(K, Cout).astype(jnp.bfloat16)

    # fold BatchNorm (inference) into an f32 affine scale/bias
    inv_std = 1.0 / jnp.sqrt(bn_var.astype(jnp.float32) + eps)
    scale = (bn_gamma.astype(jnp.float32) * inv_std).reshape(1, Cout)
    bias = (bn_beta.astype(jnp.float32)
            - bn_mean.astype(jnp.float32) * bn_gamma.astype(jnp.float32) * inv_std
            ).reshape(1, Cout)

    TP = _pick_pool_row_tile(Hm)        # pool rows per grid step
    nrows = TP * Wm                     # matmul rows per (rp, cp) group per step
    grid = (N, Hm // TP)

    out = pl.pallas_call(
        _stem_kernel,
        out_shape=jax.ShapeDtypeStruct((N, Hm * Wm, Cout), jnp.float32),
        grid=grid,
        in_specs=[
            pl.BlockSpec((None, 2, 2, nrows, K), lambda n, t: (n, 0, 0, t, 0)),
            pl.BlockSpec((K, Cout), lambda n, t: (0, 0)),
            pl.BlockSpec((1, Cout), lambda n, t: (0, 0)),
            pl.BlockSpec((1, Cout), lambda n, t: (0, 0)),
        ],
        out_specs=pl.BlockSpec((None, nrows, Cout), lambda n, t: (n, t, 0)),
        scratch_shapes=[
            pltpu.VMEM((1 + nrows, Cout), jnp.float32),    # pool-col shift
            pltpu.VMEM((Wm + nrows, Cout), jnp.float32),   # pool-row shift + halo
        ],
        compiler_params=pltpu.CompilerParams(
            dimension_semantics=("parallel", "arbitrary")),
    )(patches, w2d, scale, bias)

    out = out.reshape(N, Hm, Wm, Cout)
    return jnp.transpose(out, (0, 3, 1, 2))   # back to PyTorch NCHW


# ----------------------------- reference (pure JAX) ------------------------------


def _reference(x, w, gamma, beta, mean, var, eps=1e-5):
    y = jax.lax.conv_general_dilated(
        x, w, window_strides=(2, 2), padding=((3, 3), (3, 3)),
        dimension_numbers=("NCHW", "OIHW", "NCHW"),
        precision=jax.lax.Precision.HIGHEST,
    )
    scale = gamma / jnp.sqrt(var + eps)
    bias = beta - mean * scale
    y = y * scale[None, :, None, None] + bias[None, :, None, None]
    y = jnp.maximum(y, 0.0)
    y = jax.lax.reduce_window(
        y, -jnp.inf, jax.lax.max,
        window_dimensions=(1, 1, 3, 3),
        window_strides=(1, 1, 2, 2),
        padding=((0, 0), (0, 0), (1, 1), (1, 1)),
    )
    return y


# ----------------------------- main ----------------------------------------------

if __name__ == "__main__":
    key = jax.random.PRNGKey(0)
    k_x, k_w, k_g, k_b, k_m, k_v = jax.random.split(key, 6)

    N, C, H, W = 2, 3, 16, 16   # conv1 requires 3 input channels (RGB)
    Cout = 64

    x = jax.random.normal(k_x, (N, C, H, W), dtype=jnp.float32)
    # deterministic synthetic parameters (shapes match resnet50 conv1 / bn1)
    conv_w = jax.random.normal(k_w, (Cout, C, 7, 7), dtype=jnp.float32) * 0.05
    bn_gamma = jax.random.uniform(k_g, (Cout,), jnp.float32, 0.5, 1.5)
    bn_beta = jax.random.normal(k_b, (Cout,), jnp.float32) * 0.1
    bn_mean = jax.random.normal(k_m, (Cout,), jnp.float32) * 0.1
    bn_var = jax.random.uniform(k_v, (Cout,), jnp.float32, 0.5, 1.5)

    out = thermal_moduleA_forward(x, conv_w, bn_gamma, bn_beta, bn_mean, bn_var)
    out = jax.block_until_ready(out)

    ref = jax.block_until_ready(
        _reference(x, conv_w, bn_gamma, bn_beta, bn_mean, bn_var))

    assert out.shape == (N, Cout, H // 4, W // 4), out.shape
    # bf16 patches/weights on the MXU (f32 accumulation) -> loosened tolerance
    assert jnp.allclose(out, ref, rtol=2e-2, atol=2e-2), (
        float(jnp.max(jnp.abs(out - ref)))
    )
    print("KERNEL_OK")
</pallas_src>

<mosaic_0001>
module attributes {stable_mosaic.version = 11 : i64} {
  func.func @_stem_kernel(%arg0: i32, %arg1: i32, %arg2: memref<1x2x2x16x147xbf16, #tpu.memory_space<vmem>>, %arg3: memref<147x64xbf16, #tpu.memory_space<vmem>>, %arg4: memref<1x64xf32, #tpu.memory_space<vmem>>, %arg5: memref<1x64xf32, #tpu.memory_space<vmem>>, %arg6: memref<1x16x64xf32, #tpu.memory_space<vmem>>, %arg7: memref<17x64xf32, #tpu.memory_space<vmem>>, %arg8: memref<20x64xf32, #tpu.memory_space<vmem>>) attributes {dimension_semantics = [#tpu.dimension_semantics<parallel>, #tpu.dimension_semantics<arbitrary>], iteration_bounds = array<i64: 2, 1>, scalar_prefetch = 0 : i64, scratch_operands = 2 : i64, tpu.core_type = #tpu.core_type<tc>, window_params = [{transform_indices = @transform_0, window_bounds = array<i64: 1, 2, 2, 16, 147>}, {pipeline_mode = #tpu.pipeline_mode<synchronous>, transform_indices = @transform_1, window_bounds = array<i64: 147, 64>}, {pipeline_mode = #tpu.pipeline_mode<synchronous>, transform_indices = @transform_2, window_bounds = array<i64: 1, 64>}, {pipeline_mode = #tpu.pipeline_mode<synchronous>, transform_indices = @transform_3, window_bounds = array<i64: 1, 64>}, {transform_indices = @transform_4, window_bounds = array<i64: 1, 16, 64>}]} {
    %c0 = arith.constant 0 : index
    %c0_0 = arith.constant 0 : index
    %0 = vector.load %arg3[%c0, %c0_0] : memref<147x64xbf16, #tpu.memory_space<vmem>>, vector<147x64xbf16>
    %c0_1 = arith.constant 0 : index
    %c0_2 = arith.constant 0 : index
    %1 = vector.load %arg4[%c0_1, %c0_2] : memref<1x64xf32, #tpu.memory_space<vmem>>, vector<1x64xf32>
    %c0_3 = arith.constant 0 : index
    %c0_4 = arith.constant 0 : index
    %2 = vector.load %arg5[%c0_3, %c0_4] : memref<1x64xf32, #tpu.memory_space<vmem>>, vector<1x64xf32>
    %c0_i32 = arith.constant 0 : i32
    %3 = arith.cmpi eq, %arg1, %c0_i32 : i32
    %4 = arith.extui %3 : i1 to i32
    %c0_i32_5 = arith.constant 0 : i32
    %5 = arith.cmpi ne, %4, %c0_i32_5 : i32
    scf.if %5 {
      %cst_56 = arith.constant 0.000000e+00 : f32
      %86 = vector.broadcast %cst_56 : f32 to vector<4x64xf32>
      %c0_57 = arith.constant 0 : index
      %c0_58 = arith.constant 0 : index
      %87 = vector.load %arg8[%c0_57, %c0_58] : memref<20x64xf32, #tpu.memory_space<vmem>>, vector<4x64xf32>
      tpu.vector_store %arg8[%c0_57, %c0_58], %86 {strides = array<i32>} : memref<20x64xf32, #tpu.memory_space<vmem>>, vector<4x64xf32>,
      %cst_59 = arith.constant 0.000000e+00 : f32
      %88 = vector.broadcast %cst_59 : f32 to vector<1x64xf32>
      %c0_60 = arith.constant 0 : index
      %c0_61 = arith.constant 0 : index
      %89 = vector.load %arg7[%c0_60, %c0_61] : memref<17x64xf32, #tpu.memory_space<vmem>>, vector<1x64xf32>
      tpu.vector_store %arg7[%c0_60, %c0_61], %88 {strides = array<i32>} : memref<17x64xf32, #tpu.memory_space<vmem>>, vector<1x64xf32>,
    } else {
    }
    %6 = tpu.iota {dimensions = array<i32: 0>} : vector<16x1xi32>
    %c4_i32 = arith.constant 4 : i32
    %c0_i32_6 = arith.constant 0 : i32
    %7 = arith.cmpi eq, %c4_i32, %c0_i32_6 : i32
    %c1_i32 = arith.constant 1 : i32
    %8 = arith.select %7, %c1_i32, %c4_i32 : i32
    %9 = vector.broadcast %8 : i32 to vector<16x1xi32>
    %10 = arith.remsi %6, %9 : vector<16x1xi32>
    %c0_i32_7 = arith.constant 0 : i32
    %11 = vector.broadcast %c0_i32_7 : i32 to vector<16x1xi32>
    %12 = arith.cmpi ne, %10, %11 : vector<16x1xi32>
    %c0_i32_8 = arith.constant 0 : i32
    %13 = vector.broadcast %c0_i32_8 : i32 to vector<16x1xi32>
    %14 = arith.cmpi slt, %10, %13 : vector<16x1xi32>
    %c0_i32_9 = arith.constant 0 : i32
    %15 = arith.cmpi slt, %8, %c0_i32_9 : i32
    %16 = vector.broadcast %15 : i1 to vector<16x1xi1>
    %17 = vector.broadcast %16 : vector<16x1xi1> to vector<16x1xi1>
    %18 = arith.xori %14, %17 : vector<16x1xi1>
    %19 = arith.andi %18, %12 : vector<16x1xi1>
    %20 = vector.broadcast %8 : i32 to vector<16x1xi32>
    %21 = arith.addi %10, %20 : vector<16x1xi32>
    %22 = arith.select %19, %21, %10 : vector<16x1xi1>, vector<16x1xi32>
    %c0_i32_10 = arith.constant 0 : i32
    %23 = vector.broadcast %c0_i32_10 : i32 to vector<16x1xi32>
    %24 = arith.cmpi eq, %22, %23 : vector<16x1xi32>
    %c0_11 = arith.constant 0 : index
    %c0_12 = arith.constant 0 : index
    %c0_13 = arith.constant 0 : index
    %c0_14 = arith.constant 0 : index
    %c0_15 = arith.constant 0 : index
    %25 = vector.load %arg2[%c0_11, %c0_12, %c0_13, %c0_14, %c0_15] : memref<1x2x2x16x147xbf16, #tpu.memory_space<vmem>>, vector<1x1x1x16x147xbf16>
    %26 = vector.shape_cast %25 : vector<1x1x1x16x147xbf16> to vector<16x147xbf16>
    %cst = arith.constant dense<0.000000e+00> : vector<16x64xf32>
    %27 = tpu.matmul %26, %0, %cst {dimension_numbers = #tpu.dot_dimension_numbers<[1], [0], [0], [1], [0, 0, 1, 1], [], []>} : vector<16x147xbf16>, vector<147x64xbf16>, vector<16x64xf32> -> vector<16x64xf32>
    %28 = vector.broadcast %1 : vector<1x64xf32> to vector<16x64xf32>
    %29 = arith.mulf %27, %28 : vector<16x64xf32>
    %30 = vector.broadcast %2 : vector<1x64xf32> to vector<16x64xf32>
    %31 = arith.addf %29, %30 : vector<16x64xf32>
    %cst_16 = arith.constant 0.000000e+00 : f32
    %32 = vector.broadcast %cst_16 : f32 to vector<16x64xf32>
    %33 = arith.maximumf %31, %32 : vector<16x64xf32>
    %c0_17 = arith.constant 0 : index
    %c0_18 = arith.constant 0 : index
    %c1 = arith.constant 1 : index
    %c0_19 = arith.constant 0 : index
    %c0_20 = arith.constant 0 : index
    %34 = vector.load %arg2[%c0_17, %c0_18, %c1, %c0_19, %c0_20] : memref<1x2x2x16x147xbf16, #tpu.memory_space<vmem>>, vector<1x1x1x16x147xbf16>
    %35 = vector.shape_cast %34 : vector<1x1x1x16x147xbf16> to vector<16x147xbf16>
    %cst_21 = arith.constant dense<0.000000e+00> : vector<16x64xf32>
    %36 = tpu.matmul %35, %0, %cst_21 {dimension_numbers = #tpu.dot_dimension_numbers<[1], [0], [0], [1], [0, 0, 1, 1], [], []>} : vector<16x147xbf16>, vector<147x64xbf16>, vector<16x64xf32> -> vector<16x64xf32>
    %37 = vector.broadcast %1 : vector<1x64xf32> to vector<16x64xf32>
    %38 = arith.mulf %36, %37 : vector<16x64xf32>
    %39 = vector.broadcast %2 : vector<1x64xf32> to vector<16x64xf32>
    %40 = arith.addf %38, %39 : vector<16x64xf32>
    %cst_22 = arith.constant 0.000000e+00 : f32
    %41 = vector.broadcast %cst_22 : f32 to vector<16x64xf32>
    %42 = arith.maximumf %40, %41 : vector<16x64xf32>
    %c1_23 = arith.constant 1 : index
    %c0_24 = arith.constant 0 : index
    %43 = vector.load %arg7[%c1_23, %c0_24] : memref<17x64xf32, #tpu.memory_space<vmem>>, vector<16x64xf32>
    tpu.vector_store %arg7[%c1_23, %c0_24], %42 {strides = array<i32>} : memref<17x64xf32, #tpu.memory_space<vmem>>, vector<16x64xf32>,
    %c0_25 = arith.constant 0 : index
    %c0_26 = arith.constant 0 : index
    %44 = vector.load %arg7[%c0_25, %c0_26] : memref<17x64xf32, #tpu.memory_space<vmem>>, vector<16x64xf32>
    %cst_27 = arith.constant 0.000000e+00 : f32
    %45 = vector.shape_cast %24 : vector<16x1xi1> to vector<16x1xi1>
    %46 = vector.broadcast %45 : vector<16x1xi1> to vector<16x64xi1>
    %47 = vector.broadcast %cst_27 : f32 to vector<16x64xf32>
    %48 = arith.select %46, %47, %44 : vector<16x64xi1>, vector<16x64xf32>
    %49 = arith.maximumf %33, %42 : vector<16x64xf32>
    %50 = arith.maximumf %49, %48 : vector<16x64xf32>
    %c0_28 = arith.constant 0 : index
    %c1_29 = arith.constant 1 : index
    %c0_30 = arith.constant 0 : index
    %c0_31 = arith.constant 0 : index
    %c0_32 = arith.constant 0 : index
    %51 = vector.load %arg2[%c0_28, %c1_29, %c0_30, %c0_31, %c0_32] : memref<1x2x2x16x147xbf16, #tpu.memory_space<vmem>>, vector<1x1x1x16x147xbf16>
    %52 = vector.shape_cast %51 : vector<1x1x1x16x147xbf16> to vector<16x147xbf16>
    %cst_33 = arith.constant dense<0.000000e+00> : vector<16x64xf32>
    %53 = tpu.matmul %52, %0, %cst_33 {dimension_numbers = #tpu.dot_dimension_numbers<[1], [0], [0], [1], [0, 0, 1, 1], [], []>} : vector<16x147xbf16>, vector<147x64xbf16>, vector<16x64xf32> -> vector<16x64xf32>
    %54 = vector.broadcast %1 : vector<1x64xf32> to vector<16x64xf32>
    %55 = arith.mulf %53, %54 : vector<16x64xf32>
    %56 = vector.broadcast %2 : vector<1x64xf32> to vector<16x64xf32>
    %57 = arith.addf %55, %56 : vector<16x64xf32>
    %cst_34 = arith.constant 0.000000e+00 : f32
    %58 = vector.broadcast %cst_34 : f32 to vector<16x64xf32>
    %59 = arith.maximumf %57, %58 : vector<16x64xf32>
    %c0_35 = arith.constant 0 : index
    %c1_36 = arith.constant 1 : index
    %c1_37 = arith.constant 1 : index
    %c0_38 = arith.constant 0 : index
    %c0_39 = arith.constant 0 : index
    %60 = vector.load %arg2[%c0_35, %c1_36, %c1_37, %c0_38, %c0_39] : memref<1x2x2x16x147xbf16, #tpu.memory_space<vmem>>, vector<1x1x1x16x147xbf16>
    %61 = vector.shape_cast %60 : vector<1x1x1x16x147xbf16> to vector<16x147xbf16>
    %cst_40 = arith.constant dense<0.000000e+00> : vector<16x64xf32>
    %62 = tpu.matmul %61, %0, %cst_40 {dimension_numbers = #tpu.dot_dimension_numbers<[1], [0], [0], [1], [0, 0, 1, 1], [], []>} : vector<16x147xbf16>, vector<147x64xbf16>, vector<16x64xf32> -> vector<16x64xf32>
    %63 = vector.broadcast %1 : vector<1x64xf32> to vector<16x64xf32>
    %64 = arith.mulf %62, %63 : vector<16x64xf32>
    %65 = vector.broadcast %2 : vector<1x64xf32> to vector<16x64xf32>
    %66 = arith.addf %64, %65 : vector<16x64xf32>
    %cst_41 = arith.constant 0.000000e+00 : f32
    %67 = vector.broadcast %cst_41 : f32 to vector<16x64xf32>
    %68 = arith.maximumf %66, %67 : vector<16x64xf32>
    %c1_42 = arith.constant 1 : index
    %c0_43 = arith.constant 0 : index
    %69 = vector.load %arg7[%c1_42, %c0_43] : memref<17x64xf32, #tpu.memory_space<vmem>>, vector<16x64xf32>
    tpu.vector_store %arg7[%c1_42, %c0_43], %68 {strides = array<i32>} : memref<17x64xf32, #tpu.memory_space<vmem>>, vector<16x64xf32>,
    %c0_44 = arith.constant 0 : index
    %c0_45 = arith.constant 0 : index
    %70 = vector.load %arg7[%c0_44, %c0_45] : memref<17x64xf32, #tpu.memory_space<vmem>>, vector<16x64xf32>
    %cst_46 = arith.constant 0.000000e+00 : f32
    %71 = vector.shape_cast %24 : vector<16x1xi1> to vector<16x1xi1>
    %72 = vector.broadcast %71 : vector<16x1xi1> to vector<16x64xi1>
    %73 = vector.broadcast %cst_46 : f32 to vector<16x64xf32>
    %74 = arith.select %72, %73, %70 : vector<16x64xi1>, vector<16x64xf32>
    %75 = arith.maximumf %59, %68 : vector<16x64xf32>
    %76 = arith.maximumf %75, %74 : vector<16x64xf32>
    %c4 = arith.constant 4 : index
    %c0_47 = arith.constant 0 : index
    %77 = vector.load %arg8[%c4, %c0_47] : memref<20x64xf32, #tpu.memory_space<vmem>>, vector<16x64xf32>
    tpu.vector_store %arg8[%c4, %c0_47], %76 {strides = array<i32>} : memref<20x64xf32, #tpu.memory_space<vmem>>, vector<16x64xf32>,
    %c0_48 = arith.constant 0 : index
    %c0_49 = arith.constant 0 : index
    %78 = vector.load %arg8[%c0_48, %c0_49] : memref<20x64xf32, #tpu.memory_space<vmem>>, vector<16x64xf32>
    %79 = arith.maximumf %50, %76 : vector<16x64xf32>
    %80 = arith.maximumf %79, %78 : vector<16x64xf32>
    %c0_50 = arith.constant 0 : index
    %c0_51 = arith.constant 0 : index
    %c0_52 = arith.constant 0 : index
    %81 = vector.load %arg6[%c0_50, %c0_51, %c0_52] : memref<1x16x64xf32, #tpu.memory_space<vmem>>, vector<1x16x64xf32>
    %82 = vector.shape_cast %81 : vector<1x16x64xf32> to vector<16x64xf32>
    %83 = vector.shape_cast %80 : vector<16x64xf32> to vector<1x16x64xf32>
    tpu.vector_store %arg6[%c0_50, %c0_51, %c0_52], %83 {strides = array<i32>} : memref<1x16x64xf32, #tpu.memory_space<vmem>>, vector<1x16x64xf32>,
    %c16 = arith.constant 16 : index
    %c0_53 = arith.constant 0 : index
    %84 = vector.load %arg8[%c16, %c0_53] : memref<20x64xf32, #tpu.memory_space<vmem>>, vector<4x64xf32>
    %c0_54 = arith.constant 0 : index
    %c0_55 = arith.constant 0 : index
    %85 = vector.load %arg8[%c0_54, %c0_55] : memref<20x64xf32, #tpu.memory_space<vmem>>, vector<4x64xf32>
    tpu.vector_store %arg8[%c0_54, %c0_55], %84 {strides = array<i32>} : memref<20x64xf32, #tpu.memory_space<vmem>>, vector<4x64xf32>,
    return
  }
  func.func @transform_0(%arg0: i32, %arg1: i32) -> (i32, i32, i32, i32, i32) {
    %c0_i32 = arith.constant 0 : i32
    %c0_i32_0 = arith.constant 0 : i32
    %c0_i32_1 = arith.constant 0 : i32
    %c0_i32_2 = arith.constant 0 : i32
    return %arg0, %c0_i32, %c0_i32_0, %arg1, %c0_i32_1 : i32, i32, i32, i32, i32
  }
  func.func @transform_1(%arg0: i32, %arg1: i32) -> (i32, i32) {
    %c0_i32 = arith.constant 0 : i32
    %c0_i32_0 = arith.constant 0 : i32
    %c0_i32_1 = arith.constant 0 : i32
    return %c0_i32, %c0_i32_0 : i32, i32
  }
  func.func @transform_2(%arg0: i32, %arg1: i32) -> (i32, i32) {
    %c0_i32 = arith.constant 0 : i32
    %c0_i32_0 = arith.constant 0 : i32
    %c0_i32_1 = arith.constant 0 : i32
    return %c0_i32, %c0_i32_0 : i32, i32
  }
  func.func @transform_3(%arg0: i32, %arg1: i32) -> (i32, i32) {
    %c0_i32 = arith.constant 0 : i32
    %c0_i32_0 = arith.constant 0 : i32
    %c0_i32_1 = arith.constant 0 : i32
    return %c0_i32, %c0_i32_0 : i32, i32
  }
  func.func @transform_4(%arg0: i32, %arg1: i32) -> (i32, i32, i32) {
    %c0_i32 = arith.constant 0 : i32
    %c0_i32_0 = arith.constant 0 : i32
    return %arg0, %arg1, %c0_i32 : i32, i32, i32
  }
}

</mosaic_0001>

<llo_original>
// kernel: tpu_custom_call.1
$region0: #{tpu_custom_call.1}
  #allocation0 [shape = 'u32[]', space=smem, size = 0x4, offset = 0x4, fixed_abs, tag = 'smem constant byte address 0x4 - core index']
  #allocation1 [shape = 'u32[144,128]{1,0:T(1,128)}', space=vmem, size = 0x12000, scoped, tag = 'internal scratch']
  #allocation2 [shape = 'f32[17,64]{1,0:T(8,128)}', space=vmem, size = 0x3000, scoped, tag = 'scratch operand']
  #allocation3 [shape = 'f32[20,64]{1,0:T(8,128)}', space=vmem, size = 0x3000, scoped, tag = 'scratch operand']
  %s0 = inlined_call_operand.vmem [shape: bf16[2,2,2,16,147], index: 0, kind: input, shape index: {}]
  %s1 = inlined_call_operand.vmem [shape: bf16[147,64], index: 1, kind: input, shape index: {}]
  %s2 = inlined_call_operand.vmem [shape: f32[1,64], index: 2, kind: input, shape index: {}]
  %s3 = inlined_call_operand.vmem [shape: f32[1,64], index: 3, kind: input, shape index: {}]
  %s4 = inlined_call_operand.hbm [shape: f32[2,16,64], index: 4, kind: output, shape index: {}]
  %s5 = sld [smem:[#allocation0]]
  $region53: #{tpu_custom_call.1} parent=0
    _
  %s7 = ssub.s32 1, %s5
  %s8 = scalar_select 0, %s7, %s5
  $region1: #{tpu_custom_call.1} parent=0
    #allocation4 [shape = 'u8[16384]{0}', space=vmem, size = 0x4000, scoped, tag = 'output window, operand 0']
    #allocation5 [shape = 's32[2]{0}', space=sflag, size = 0x8, scoped, tag = 'scoped memory for tpu_custom_call.1']
    %9 = vsyncpa [#allocation5], 0
    %s10 = scalar_lea.sflag [#allocation5], 1
    %11 = vsyncpa %s10, 0
    loop: start=0, step=1, limit=4
    $region2: #{tpu_custom_call.1} parent=1 // loop_pre_header
      _
    $region3: #{tpu_custom_call.1} parent=1 // loop_header
      %s13 = sphi 0, %s17
      %p14 = scmp.ge.s32.totalorder %s13, 4
      %s20 = sphi 0, %s32
      %s21 = sphi 0, %s28
      %s22 = sphi 0, %s20
      %s23 = sphi 0, %s21
      %s24 = sphi 0, %s22
      %s25 = sphi 0, %s23
      %s37 = sphi 0, %s39
      %s40 = sphi 0, %s37
      %s41 = sphi 0, %s40
      %s57 = sphi 0, %s41
      %s61 = sphi 0, %s61
      %s63 = sphi 0, %s61
      %s64 = sphi 0, %s63
      %s78 = sphi 0, %s64
      %s82 = sphi 0, %s82
      %s84 = sphi 0, %s82
      %s85 = sphi 0, %s84
      %s99 = sphi 0, %s85
      %s103 = sphi 0, %s103
      %s105 = sphi 0, %s103
      %s106 = sphi 0, %s105
      %s120 = sphi 0, %s106
      %s128 = sphi 0, %s130
      %s131 = sphi 0, %s128
      %s132 = sphi 0, %s131
      %s148 = sphi 0, %s132
    $region4: #{tpu_custom_call.1} parent=1 // loop_header_branch
      %16 = sbr.rel (%p14) target = $region8
    $region5: #{tpu_custom_call.1} parent=1 // loop_body
      %s18 = ssub.s32 %s13, 1
      %s19 = ssub.s32 %s13, 2
      %s26 = sadd.s32 1, %s21
      %p27 = scmp.ge.s32.totalorder %s26, 1
      %s28 = scalar_select %p27, 0, %s26
      %s29 = sadd.s32 1, %s20
      %s30 = scalar_select %p27, %s29, %s20
      %p31 = scmp.ge.s32.totalorder %s30, 2
      %s32 = scalar_select %p31, 0, %s30
      %s33 = ssub.s32 %s20, %s32
      %s34 = ssub.s32 %s21, %s28
      %s35 = sor.u32 %s33, %s34
      %p36 = scmp.eq.s32.totalorder %s35, 0
      %s38 = sadd.s32 %s37, 1
      %s39 = scalar_select %p36, %s37, %s38
      %p42 = pneg %p36
      %p43 = scmp.eq.s32.totalorder %s13, 1
      %p44 = por %p42, %p43
      %p45 = scmp.ne.s32.totalorder %s37, %s40
      %p46 = scmp.eq.s32.totalorder %s13, 0
      %p47 = por %p45, %p46
      %p48 = scmp.ne.s32.totalorder %s37, %s40
      %p49 = scmp.eq.s32.totalorder %s18, 1
      %p50 = por %p48, %p49
      %p51 = scmp.ne.s32.totalorder %s40, %s41
      %p52 = scmp.eq.s32.totalorder %s18, 0
      %p53 = por %p51, %p52
      %p54 = scmp.ne.s32.totalorder %s40, %s41
      %p55 = scmp.eq.s32.totalorder %s19, 1
      %p56 = por %p54, %p55
      %p58 = scmp.ne.s32.totalorder %s41, %s57
      %p59 = scmp.eq.s32.totalorder %s19, 0
      %p60 = por %p58, %p59
      %s62 = sadd.s32 %s61, 1
      %p65 = scmp.eq.s32.totalorder %s13, 1
      %p66 = scmp.ne.s32.totalorder %s61, %s63
      %p67 = scmp.eq.s32.totalorder %s13, 0
      %p68 = por %p66, %p67
      %p69 = scmp.ne.s32.totalorder %s61, %s63
      %p70 = scmp.eq.s32.totalorder %s18, 1
      %p71 = por %p69, %p70
      %p72 = scmp.ne.s32.totalorder %s63, %s64
      %p73 = scmp.eq.s32.totalorder %s18, 0
      %p74 = por %p72, %p73
      %p75 = scmp.ne.s32.totalorder %s63, %s64
      %p76 = scmp.eq.s32.totalorder %s19, 1
      %p77 = por %p75, %p76
      %p79 = scmp.ne.s32.totalorder %s64, %s78
      %p80 = scmp.eq.s32.totalorder %s19, 0
      %p81 = por %p79, %p80
      %s83 = sadd.s32 %s82, 1
      %p86 = scmp.eq.s32.totalorder %s13, 1
      %p87 = scmp.ne.s32.totalorder %s82, %s84
      %p88 = scmp.eq.s32.totalorder %s13, 0
      %p89 = por %p87, %p88
      %p90 = scmp.ne.s32.totalorder %s82, %s84
      %p91 = scmp.eq.s32.totalorder %s18, 1
      %p92 = por %p90, %p91
      %p93 = scmp.ne.s32.totalorder %s84, %s85
      %p94 = scmp.eq.s32.totalorder %s18, 0
      %p95 = por %p93, %p94
      %p96 = scmp.ne.s32.totalorder %s84, %s85
      %p97 = scmp.eq.s32.totalorder %s19, 1
      %p98 = por %p96, %p97
      %p100 = scmp.ne.s32.totalorder %s85, %s99
      %p101 = scmp.eq.s32.totalorder %s19, 0
      %p102 = por %p100, %p101
      %s104 = sadd.s32 %s103, 1
      %p107 = scmp.eq.s32.totalorder %s13, 1
      %p108 = scmp.ne.s32.totalorder %s103, %s105
      %p109 = scmp.eq.s32.totalorder %s13, 0
      %p110 = por %p108, %p109
      %p111 = scmp.ne.s32.totalorder %s103, %s105
      %p112 = scmp.eq.s32.totalorder %s18, 1
      %p113 = por %p111, %p112
      %p114 = scmp.ne.s32.totalorder %s105, %s106
      %p115 = scmp.eq.s32.totalorder %s18, 0
      %p116 = por %p114, %p115
      %p117 = scmp.ne.s32.totalorder %s105, %s106
      %p118 = scmp.eq.s32.totalorder %s19, 1
      %p119 = por %p117, %p118
      %p121 = scmp.ne.s32.totalorder %s106, %s120
      %p122 = scmp.eq.s32.totalorder %s19, 0
      %p123 = por %p121, %p122
      %s124 = ssub.s32 %s20, %s32
      %s125 = ssub.s32 %s21, %s28
      %s126 = sor.u32 %s124, %s125
      %p127 = scmp.eq.s32.totalorder %s126, 0
      %s129 = sadd.s32 %s128, 1
      %s130 = scalar_select %p127, %s128, %s129
      %p133 = pneg %p127
      %p134 = scmp.eq.s32.totalorder %s13, 1
      %p135 = por %p133, %p134
      %p136 = scmp.ne.s32.totalorder %s128, %s131
      %p137 = scmp.eq.s32.totalorder %s13, 0
      %p138 = por %p136, %p137
      %p139 = scmp.ne.s32.totalorder %s128, %s131
      %p140 = scmp.eq.s32.totalorder %s18, 1
      %p141 = por %p139, %p140
      %p142 = scmp.ne.s32.totalorder %s131, %s132
      %p143 = scmp.eq.s32.totalorder %s18, 0
      %p144 = por %p142, %p143
      %p145 = scmp.ne.s32.totalorder %s131, %s132
      %p146 = scmp.eq.s32.totalorder %s19, 1
      %p147 = por %p145, %p146
      %p149 = scmp.ne.s32.totalorder %s132, %s148
      %p150 = scmp.eq.s32.totalorder %s19, 0
      %p151 = por %p149, %p150
      %p152 = scmp.le.s32.totalorder 1, %s13
      %p153 = scmp.lt.s32.totalorder %s13, 3
      %p154 = pnand %p152, %p153
      %p155 = pneg %p154
      // Predicated region
      $region9: #{tpu_custom_call.1} parent=5 // pred_check
        _
      $region10: #{tpu_custom_call.1} parent=5 // pred_check_branch
        %157 = sbr.rel (%p154) target = $region12
      $region11: #{tpu_custom_call.1} parent=5 // pred_region
        %s158 = ssub.s32 %s13, 1
        // Predicated region
        $region13: #{tpu_custom_call.1} parent=11 // pred_check
          %p159 = pneg %p74
        $region14: #{tpu_custom_call.1} parent=11 // pred_check_branch
          %161 = sbr.rel (%p159) target = $region16
        $region15: #{tpu_custom_call.1} parent=11 // pred_region
          _
        $region16: #{tpu_custom_call.1} parent=11 // pred_fallthru
          _
        // Predicated region
        $region17: #{tpu_custom_call.1} parent=11 // pred_check
          %p162 = pneg %p95
        $region18: #{tpu_custom_call.1} parent=11 // pred_check_branch
          %164 = sbr.rel (%p162) target = $region20
        $region19: #{tpu_custom_call.1} parent=11 // pred_region
          _
        $region20: #{tpu_custom_call.1} parent=11 // pred_fallthru
          _
        // Predicated region
        $region21: #{tpu_custom_call.1} parent=11 // pred_check
          %p165 = pneg %p116
        $region22: #{tpu_custom_call.1} parent=11 // pred_check_branch
          %167 = sbr.rel (%p165) target = $region24
        $region23: #{tpu_custom_call.1} parent=11 // pred_region
          _
        $region24: #{tpu_custom_call.1} parent=11 // pred_fallthru
          _
      $region12: #{tpu_custom_call.1} parent=5 // pred_fallthru
        _
      %p168 = scmp.lt.s32.totalorder %s13, 2
      // Predicated region
      $region25: #{tpu_custom_call.1} parent=5 // pred_check
        %p169 = pneg %p168
      $region26: #{tpu_custom_call.1} parent=5 // pred_check_branch
        %171 = sbr.rel (%p169) target = $region28
      $region27: #{tpu_custom_call.1} parent=5 // pred_region
        // Predicated region
        $region29: #{tpu_custom_call.1} parent=27 // pred_check
          %p172 = pneg %p47
        $region30: #{tpu_custom_call.1} parent=27 // pred_check_branch
          %174 = sbr.rel (%p172) target = $region32
        $region31: #{tpu_custom_call.1} parent=27 // pred_region
          %s175 = smul.u32 2, %s21
          %p176 = scmp.lt.s32.totalorder %s20, 1
          %s177 = scalar_select %p176, %s20, 1
          %p178 = scmp.lt.s32.totalorder %s175, 1
          %s179 = scalar_select %p178, %s175, 1
          %s180 = smul.addr %s179, 2
          %s181 = smul.addr %s177, 16
          %s182 = sadd.s32 %s180, %s181
          %s183 = smul.addr %s182, 4
          %s184 = scalar_lea.vmem %s0, %s183
          %s185 = smul.u32 2, %s21
        $region32: #{tpu_custom_call.1} parent=27 // pred_fallthru
          _
      $region28: #{tpu_custom_call.1} parent=5 // pred_fallthru
        _
      %p186 = scmp.le.s32.totalorder 1, %s13
      %p187 = scmp.lt.s32.totalorder %s13, 3
      %p188 = pnand %p186, %p187
      %p189 = pneg %p188
      // Predicated region
      $region33: #{tpu_custom_call.1} parent=5 // pred_check
        _
      $region34: #{tpu_custom_call.1} parent=5 // pred_check_branch
        %191 = sbr.rel (%p188) target = $region36
      $region35: #{tpu_custom_call.1} parent=5 // pred_region
        %s192 = ssub.s32 %s13, 1
        %s193 = smul.u32 2, %s23
        %p194 = scmp.lt.s32.totalorder %s22, 1
        %s195 = scalar_select %p194, %s22, 1
        %p196 = scmp.lt.s32.totalorder %s193, 1
        %s197 = scalar_select %p196, %s193, 1
        %s198 = smul.addr %s197, 2
        %s199 = smul.addr %s195, 16
        %s200 = sadd.s32 %s198, %s199
        %s201 = smul.addr %s200, 4
        %s202 = scalar_lea.vmem %s0, %s201
        %p203 = pneg %p53
        %p204 = pneg %p50
        %p205 = pneg %p74
        %p206 = pneg %p71
        %p207 = pneg %p95
        %p208 = pneg %p92
        %p209 = pneg %p116
        %p210 = pneg %p113
        %p211 = pneg %p144
        %p212 = pneg %p141
        %s213 = sand.u32 %s131, 1
        %s214 = scalar_lea.sflag [#allocation5], %s213
        %s215 = sand.u32 %s131, 1
        %s216 = smul.addr %s215, 16
        %s217 = scalar_lea.vmem [#allocation4], %s216
        %s218 = smul.u32 2, %s23
        %p219 = scmp.lt.s32.totalorder %s22, 1
        %s220 = scalar_select %p219, %s22, 1
        %p221 = scmp.lt.s32.totalorder %s218, 1
        %s222 = scalar_select %p221, %s218, 1
        %s223 = smul.addr %s222, 2
        %s224 = smul.addr %s220, 16
        %s225 = sadd.s32 %s223, %s224
        %s226 = smul.addr %s225, 4
        %s227 = scalar_lea.vmem %s0, %s226
        %s228 = smul.u32 2, %s23
        %s229 = smul.u32 2, %s23
        %v231 = vld [vmem:[%s1] sm:$0xf]
        %v232 = vld [vmem:[%s1 + $0x4] sm:$0xf]
        %v233 = vld [vmem:[%s1 + $0x8] sm:$0xf]
        %v234 = vld [vmem:[%s1 + $0xc] sm:$0xf]
        %v235 = vld [vmem:[%s1 + $0x10] sm:$0xf]
        %v236 = vld [vmem:[%s1 + $0x14] sm:$0xf]
        %v237 = vld [vmem:[%s1 + $0x18] sm:$0xf]
        %v238 = vld [vmem:[%s1 + $0x1c] sm:$0xf]
        %v239 = vld [vmem:[%s1 + $0x20] sm:$0xf]
        %v240 = vld [vmem:[%s1 + $0x24] sm:$0xf]
        %v241 = vld [vmem:[%s1 + $0x28] sm:$0xf]
        %v242 = vld [vmem:[%s1 + $0x2c] sm:$0xf]
        %v243 = vld [vmem:[%s1 + $0x30] sm:$0xf]
        %v244 = vld [vmem:[%s1 + $0x34] sm:$0xf]
        %v245 = vld [vmem:[%s1 + $0x38] sm:$0xf]
        %v246 = vld [vmem:[%s1 + $0x3c] sm:$0xf]
        %v247 = vld [vmem:[%s1 + $0x40] sm:$0xf]
        %v248 = vld [vmem:[%s1 + $0x44] sm:$0xf]
        %v249 = vld [vmem:[%s1 + $0x48] sm:$0x3]
        %v250 = vld [vmem:[%s2] sm:$0x1]
        %v251 = vld [vmem:[%s3] sm:$0x1]
        %p252 = scmp.eq.s32.totalorder %s23, 0
        // Predicated region
        $region37: #{tpu_custom_call.1} parent=35 // pred_check
          %p253 = pneg %p252
        $region38: #{tpu_custom_call.1} parent=35 // pred_check_branch
          %255 = sbr.rel (%p253) target = $region40
        $region39: #{tpu_custom_call.1} parent=35 // pred_region
          %vm256 = vcmask 519168
          %257 = vst.msk [vmem:[#allocation3] sm:$0xf] %vm256, 0.0
          %vm258 = vcmask 516096
          %259 = vst.msk [vmem:[#allocation2] sm:$0x1] %vm258, 0.0
        $region40: #{tpu_custom_call.1} parent=35 // pred_fallthru
          _
        %v260 = vlaneseq
        %v261 = vshrl.u32 %v260, 7
        %v262 = vadd.s32 %v261, 8
        %vm263 = vcmp.lt.s32.totalorder %v261, 0
        %v264 = vsub.s32 0, %v261
        %v265 = vsel %vm263, %v264, %v261
        %v266 = vshrl.u32 %v265, 2
        %v267 = vand.u32 %v265, 3
        %v268 = vsub.s32 0, %v267
        %v269 = vsel %vm263, %v268, %v267
        %vm270 = vcmp.lt.s32.totalorder %v262, 0
        %v271 = vsub.s32 0, %v262
        %v272 = vsel %vm270, %v271, %v262
        %v273 = vshrl.u32 %v272, 2
        %v274 = vand.u32 %v272, 3
        %v275 = vsub.s32 0, %v274
        %v276 = vsel %vm270, %v275, %v274
        %vm277 = vcmp.ne.s32.totalorder %v269, 0
        %vm278 = vcmp.ne.s32.totalorder %v276, 0
        %vm279 = vcmp.lt.s32.totalorder %v269, 0
        %vm280 = vcmp.lt.s32.totalorder %v276, 0
        %vm281 = vmand %vm279, %vm277
        %vm282 = vmand %vm280, %vm278
        %v283 = vadd.s32 %v269, 4
        %v284 = vadd.s32 %v276, 4
        %v285 = vsel %vm281, %v283, %v269
        %v286 = vsel %vm282, %v284, %v276
        %vm287 = vcmp.eq.s32.totalorder %v285, 0
        %vm288 = vcmp.eq.s32.totalorder %v286, 0
        %v289 = vld [vmem:[%s227] sm:$0xff]
        %v290 = vld [vmem:[%s227 + $0x8] sm:$0xff]
        %v293 = vunpack.c.l.b16 %v289
        %v294 = vunpack.c.h.b16 %v289
        %v295 = vunpack.c.l.b16 %v290
        %v296 = vunpack.c.h.b16 %v290
        %v297 = vpack.c.b16 %v295, %v293
        %v298 = vpack.c.b16 %v296, %v294
        %v319 = vunpack.c.l.b16 %v231
        %v320 = vunpack.c.l.b16 %v232
        %v321 = vunpack.c.l.b16 %v233
        %v322 = vunpack.c.l.b16 %v234
        %v323 = vunpack.c.l.b16 %v235
        %v324 = vunpack.c.l.b16 %v236
        %v325 = vunpack.c.l.b16 %v237
        %v326 = vunpack.c.l.b16 %v238
        %v327 = vunpack.c.l.b16 %v239
        %v328 = vunpack.c.l.b16 %v240
        %v329 = vunpack.c.l.b16 %v241
        %v330 = vunpack.c.l.b16 %v242
        %v331 = vunpack.c.l.b16 %v243
        %v332 = vunpack.c.l.b16 %v244
        %v333 = vunpack.c.l.b16 %v245
        %v334 = vunpack.c.l.b16 %v246
        %v335 = vunpack.c.l.b16 %v247
        %v336 = vunpack.c.l.b16 %v248
        %v337 = vunpack.c.l.b16 %v249
        %v338 = vpack.c.b16 %v320, %v319
        %v339 = vpack.c.b16 %v322, %v321
        %v340 = vpack.c.b16 %v324, %v323
        %v341 = vpack.c.b16 %v326, %v325
        %v342 = vpack.c.b16 %v328, %v327
        %v343 = vpack.c.b16 %v330, %v329
        %v344 = vpack.c.b16 %v332, %v331
        %v345 = vpack.c.b16 %v334, %v333
        %v346 = vpack.c.b16 %v336, %v335
        %v347 = vpack.c.b16 %v337, %v337
        %vm357 = vcmask 154624
        %v359 = vsel %vm357, %v298, 0
        %vm361 = vcmask 1040384
        %vm362 = vcmask 1041408
        %v363 = vsel %vm361, 4294967295, 65535
        %v364 = vsel %vm362, %v363, 0
        %v366 = vand.u32 %v347, %v364
        %368 = vmatprep.subr.bf16.mxu0 0
        %369 = vmatpush1.bf16.msra.mxu0 %v338
        %370 = vmatprep.subr.bf16.mxu0 0
        %371 = vmatpush1.bf16.msra.mxu0 %v339
        %372 = vmatprep.subr.bf16.mxu0 0
        %373 = vmatpush1.bf16.msra.mxu0 %v340
        %374 = vmatprep.subr.bf16.mxu0 0
        %375 = vmatpush1.bf16.msra.mxu0 %v341
        %376 = vmatprep.subr.bf16.mxu0 0
        %377 = vmatpush1.bf16.msra.mxu0 %v342
        %378 = vmatprep.subr.bf16.mxu0 0
        %379 = vmatpush1.bf16.msra.mxu0 %v343
        %380 = vmatprep.subr.bf16.mxu0 0
        %381 = vmatpush1.bf16.msra.mxu0 %v344
        %382 = vmatprep.subr.bf16.mxu0 0
        %383 = vmatpush1.bf16.msra.mxu0 %v345
        %384 = vmatprep.subr.bf16.mxu0 0
        %385 = vmatpush1.bf16.msra.mxu0 %v346
        %386 = vmatprep.subr.bf16.mxu0 0
        %387 = vmatpush1.bf16.msra.mxu0 %v366
        %388 = vmatprep.subr.bf16.mxu0 0
        %389 = vmatpush1.bf16.msra.mxu0 0
        %390 = vmatprep.subr.bf16.mxu0 0
        %391 = vmatpush1.bf16.msra.mxu0 0
        %392 = vmatprep.subr.bf16.mxu0 0
        %393 = vmatpush1.bf16.msra.mxu0 0
        %394 = vmatprep.subr.bf16.mxu0 0
        %395 = vmatpush1.bf16.msra.mxu0 0
        %396 = vmatprep.subr.bf16.mxu0 0
        %397 = vmatpush1.bf16.msra.mxu0 0
        %398 = vmatprep.subr.bf16.mxu0 0
        %399 = vmatpush1.bf16.msra.mxu0 0
        %400 = vmatprep.mubr.bf16.mxu0 %v359
        %401 = vmatmul.mubr.bf16.gmra.mrb[0].mxu0 %v297
        %v402 = vpop.f32.mrb[0].mxu0
        %v403 = vadd.f32 0.0, %v402
        %v404 = vpop.f32.mrb[0].mxu0
        %v405 = vpop.f32.mrb[0].mxu0
        %v406 = vadd.f32 0.0, %v405
        %v407 = vpop.f32.mrb[0].mxu0
        %408 = vdwg.mxu0
        %v410 = vlaneseq
        %v411 = vshrl.u32 %v410, 7
        %v412 = vsub.s32 0, %v411
        %v413 = vrot.slane %v250, %v412
        %v415 = vmul.f32 %v403, %v413
        %v416 = vmul.f32 %v406, %v413
        %v418 = vlaneseq
        %v419 = vshrl.u32 %v418, 7
        %v420 = vsub.s32 0, %v419
        %v421 = vrot.slane %v251, %v420
        %v423 = vadd.f32 %v415, %v421
        %v424 = vadd.f32 %v416, %v421
        %v425 = vmax.f32 %v423, 0.0
        %v426 = vmax.f32 %v424, 0.0
        %s427 = scalar_lea.vmem %s227, 16
        %v428 = vld [vmem:[%s427] sm:$0xff]
        %v429 = vld [vmem:[%s427 + $0x8] sm:$0xff]
        %v432 = vunpack.c.l.b16 %v428
        %v433 = vunpack.c.h.b16 %v428
        %v434 = vunpack.c.l.b16 %v429
        %v435 = vunpack.c.h.b16 %v429
        %v436 = vpack.c.b16 %v434, %v432
        %v437 = vpack.c.b16 %v435, %v433
        %v440 = vsel %vm357, %v437, 0
        %442 = vmatprep.subr.bf16.mxu0 0
        %443 = vmatpush1.bf16.msra.mxu0 %v338
        %444 = vmatprep.subr.bf16.mxu0 0
        %445 = vmatpush1.bf16.msra.mxu0 %v339
        %446 = vmatprep.subr.bf16.mxu0 0
        %447 = vmatpush1.bf16.msra.mxu0 %v340
        %448 = vmatprep.subr.bf16.mxu0 0
        %449 = vmatpush1.bf16.msra.mxu0 %v341
        %450 = vmatprep.subr.bf16.mxu0 0
        %451 = vmatpush1.bf16.msra.mxu0 %v342
        %452 = vmatprep.subr.bf16.mxu0 0
        %453 = vmatpush1.bf16.msra.mxu0 %v343
        %454 = vmatprep.subr.bf16.mxu0 0
        %455 = vmatpush1.bf16.msra.mxu0 %v344
        %456 = vmatprep.subr.bf16.mxu0 0
        %457 = vmatpush1.bf16.msra.mxu0 %v345
        %458 = vmatprep.subr.bf16.mxu0 0
        %459 = vmatpush1.bf16.msra.mxu0 %v346
        %460 = vmatprep.subr.bf16.mxu0 0
        %461 = vmatpush1.bf16.msra.mxu0 %v366
        %462 = vmatprep.subr.bf16.mxu0 0
        %463 = vmatpush1.bf16.msra.mxu0 0
        %464 = vmatprep.subr.bf16.mxu0 0
        %465 = vmatpush1.bf16.msra.mxu0 0
        %466 = vmatprep.subr.bf16.mxu0 0
        %467 = vmatpush1.bf16.msra.mxu0 0
        %468 = vmatprep.subr.bf16.mxu0 0
        %469 = vmatpush1.bf16.msra.mxu0 0
        %470 = vmatprep.subr.bf16.mxu0 0
        %471 = vmatpush1.bf16.msra.mxu0 0
        %472 = vmatprep.subr.bf16.mxu0 0
        %473 = vmatpush1.bf16.msra.mxu0 0
        %474 = vmatprep.mubr.bf16.mxu0 %v440
        %475 = vmatmul.mubr.bf16.gmra.mrb[0].mxu0 %v436
        %v476 = vpop.f32.mrb[0].mxu0
        %v477 = vadd.f32 0.0, %v476
        %v478 = vpop.f32.mrb[0].mxu0
        %v479 = vpop.f32.mrb[0].mxu0
        %v480 = vadd.f32 0.0, %v479
        %v481 = vpop.f32.mrb[0].mxu0
        %482 = vdwg.mxu0
        %v483 = vmul.f32 %v477, %v413
        %v484 = vmul.f32 %v480, %v413
        %v485 = vadd.f32 %v483, %v421
        %v486 = vadd.f32 %v484, %v421
        %v487 = vmax.f32 %v485, 0.0
        %v488 = vmax.f32 %v486, 0.0
        %vm489 = vcmask 523264
        %490 = vst.msk [vmem:[#allocation2 + $0x1] sm:$0xff] %vm489, %v487
        %491 = vst.msk [vmem:[#allocation2 + $0x9] sm:$0xff] %vm489, %v488
        %v492 = vld [vmem:[#allocation2] sm:$0xff]
        %v493 = vld [vmem:[#allocation2 + $0x8] sm:$0xff]
        %v494 = vsel %vm287, 1, 0
        %v495 = vsel %vm288, 1, 0
        %vm496 = vcmp.eq.s32.totalorder %v494, 1
        %vm497 = vcmp.eq.s32.totalorder %v495, 1
        %v498 = vsel %vm496, 0.0, %v492
        %v499 = vsel %vm497, 0.0, %v493
        %v500 = vmax.f32 %v425, %v487
        %v501 = vmax.f32 %v426, %v488
        %v502 = vmax.f32 %v500, %v498
        %v503 = vmax.f32 %v501, %v499
        %s504 = scalar_lea.vmem %s227, 32
        %v505 = vld [vmem:[%s504] sm:$0xff]
        %v506 = vld [vmem:[%s504 + $0x8] sm:$0xff]
        %v509 = vunpack.c.l.b16 %v505
        %v510 = vunpack.c.h.b16 %v505
        %v511 = vunpack.c.l.b16 %v506
        %v512 = vunpack.c.h.b16 %v506
        %v513 = vpack.c.b16 %v511, %v509
        %v514 = vpack.c.b16 %v512, %v510
        %v517 = vsel %vm357, %v514, 0
        %519 = vmatprep.subr.bf16.mxu0 0
        %520 = vmatpush1.bf16.msra.mxu0 %v338
        %521 = vmatprep.subr.bf16.mxu0 0
        %522 = vmatpush1.bf16.msra.mxu0 %v339
        %523 = vmatprep.subr.bf16.mxu0 0
        %524 = vmatpush1.bf16.msra.mxu0 %v340
        %525 = vmatprep.subr.bf16.mxu0 0
        %526 = vmatpush1.bf16.msra.mxu0 %v341
        %527 = vmatprep.subr.bf16.mxu0 0
        %528 = vmatpush1.bf16.msra.mxu0 %v342
        %529 = vmatprep.subr.bf16.mxu0 0
        %530 = vmatpush1.bf16.msra.mxu0 %v343
        %531 = vmatprep.subr.bf16.mxu0 0
        %532 = vmatpush1.bf16.msra.mxu0 %v344
        %533 = vmatprep.subr.bf16.mxu0 0
        %534 = vmatpush1.bf16.msra.mxu0 %v345
        %535 = vmatprep.subr.bf16.mxu0 0
        %536 = vmatpush1.bf16.msra.mxu0 %v346
        %537 = vmatprep.subr.bf16.mxu0 0
        %538 = vmatpush1.bf16.msra.mxu0 %v366
        %539 = vmatprep.subr.bf16.mxu0 0
        %540 = vmatpush1.bf16.msra.mxu0 0
        %541 = vmatprep.subr.bf16.mxu0 0
        %542 = vmatpush1.bf16.msra.mxu0 0
        %543 = vmatprep.subr.bf16.mxu0 0
        %544 = vmatpush1.bf16.msra.mxu0 0
        %545 = vmatprep.subr.bf16.mxu0 0
        %546 = vmatpush1.bf16.msra.mxu0 0
        %547 = vmatprep.subr.bf16.mxu0 0
        %548 = vmatpush1.bf16.msra.mxu0 0
        %549 = vmatprep.subr.bf16.mxu0 0
        %550 = vmatpush1.bf16.msra.mxu0 0
        %551 = vmatprep.mubr.bf16.mxu0 %v517
        %552 = vmatmul.mubr.bf16.gmra.mrb[0].mxu0 %v513
        %v553 = vpop.f32.mrb[0].mxu0
        %v554 = vadd.f32 0.0, %v553
        %v555 = vpop.f32.mrb[0].mxu0
        %v556 = vpop.f32.mrb[0].mxu0
        %v557 = vadd.f32 0.0, %v556
        %v558 = vpop.f32.mrb[0].mxu0
        %559 = vdwg.mxu0
        %v560 = vmul.f32 %v554, %v413
        %v561 = vmul.f32 %v557, %v413
        %v562 = vadd.f32 %v560, %v421
        %v563 = vadd.f32 %v561, %v421
        %v564 = vmax.f32 %v562, 0.0
        %v565 = vmax.f32 %v563, 0.0
        %s566 = scalar_lea.vmem %s227, 48
        %v567 = vld [vmem:[%s566] sm:$0xff]
        %v568 = vld [vmem:[%s566 + $0x8] sm:$0xff]
        %v571 = vunpack.c.l.b16 %v567
        %v572 = vunpack.c.h.b16 %v567
        %v573 = vunpack.c.l.b16 %v568
        %v574 = vunpack.c.h.b16 %v568
        %v575 = vpack.c.b16 %v573, %v571
        %v576 = vpack.c.b16 %v574, %v572
        %v579 = vsel %vm357, %v576, 0
        %581 = vmatprep.subr.bf16.mxu0 0
        %582 = vmatpush1.bf16.msra.mxu0 %v338
        %583 = vmatprep.subr.bf16.mxu0 0
        %584 = vmatpush1.bf16.msra.mxu0 %v339
        %585 = vmatprep.subr.bf16.mxu0 0
        %586 = vmatpush1.bf16.msra.mxu0 %v340
        %587 = vmatprep.subr.bf16.mxu0 0
        %588 = vmatpush1.bf16.msra.mxu0 %v341
        %589 = vmatprep.subr.bf16.mxu0 0
        %590 = vmatpush1.bf16.msra.mxu0 %v342
        %591 = vmatprep.subr.bf16.mxu0 0
        %592 = vmatpush1.bf16.msra.mxu0 %v343
        %593 = vmatprep.subr.bf16.mxu0 0
        %594 = vmatpush1.bf16.msra.mxu0 %v344
        %595 = vmatprep.subr.bf16.mxu0 0
        %596 = vmatpush1.bf16.msra.mxu0 %v345
        %597 = vmatprep.subr.bf16.mxu0 0
        %598 = vmatpush1.bf16.msra.mxu0 %v346
        %599 = vmatprep.subr.bf16.mxu0 0
        %600 = vmatpush1.bf16.msra.mxu0 %v366
        %601 = vmatprep.subr.bf16.mxu0 0
        %602 = vmatpush1.bf16.msra.mxu0 0
        %603 = vmatprep.subr.bf16.mxu0 0
        %604 = vmatpush1.bf16.msra.mxu0 0
        %605 = vmatprep.subr.bf16.mxu0 0
        %606 = vmatpush1.bf16.msra.mxu0 0
        %607 = vmatprep.subr.bf16.mxu0 0
        %608 = vmatpush1.bf16.msra.mxu0 0
        %609 = vmatprep.subr.bf16.mxu0 0
        %610 = vmatpush1.bf16.msra.mxu0 0
        %611 = vmatprep.subr.bf16.mxu0 0
        %612 = vmatpush1.bf16.msra.mxu0 0
        %613 = vmatprep.mubr.bf16.mxu0 %v579
        %614 = vmatmul.mubr.bf16.gmra.mrb[0].mxu0 %v575
        %v615 = vpop.f32.mrb[0].mxu0
        %v616 = vadd.f32 0.0, %v615
        %v617 = vpop.f32.mrb[0].mxu0
        %v618 = vpop.f32.mrb[0].mxu0
        %v619 = vadd.f32 0.0, %v618
        %v620 = vpop.f32.mrb[0].mxu0
        %621 = vdwg.mxu0
        %v622 = vmul.f32 %v616, %v413
        %v623 = vmul.f32 %v619, %v413
        %v624 = vadd.f32 %v622, %v421
        %v625 = vadd.f32 %v623, %v421
        %v626 = vmax.f32 %v624, 0.0
        %v627 = vmax.f32 %v625, 0.0
        %628 = vst.msk [vmem:[#allocation2 + $0x1] sm:$0xff] %vm489, %v626
        %629 = vst.msk [vmem:[#allocation2 + $0x9] sm:$0xff] %vm489, %v627
        %v630 = vld [vmem:[#allocation2] sm:$0xff]
        %v631 = vld [vmem:[#allocation2 + $0x8] sm:$0xff]
        %v632 = vsel %vm496, 0.0, %v630
        %v633 = vsel %vm497, 0.0, %v631
        %v634 = vmax.f32 %v564, %v626
        %v635 = vmax.f32 %v565, %v627
        %v636 = vmax.f32 %v634, %v632
        %v637 = vmax.f32 %v635, %v633
        %638 = vst.msk [vmem:[#allocation3 + $0x4] sm:$0xff] %vm489, %v636
        %639 = vst.msk [vmem:[#allocation3 + $0xc] sm:$0xff] %vm489, %v637
        %v640 = vld [vmem:[#allocation3] sm:$0xff]
        %v641 = vld [vmem:[#allocation3 + $0x8] sm:$0xff]
        %v642 = vmax.f32 %v502, %v636
        %v643 = vmax.f32 %v503, %v637
        %v644 = vmax.f32 %v642, %v640
        %v645 = vmax.f32 %v643, %v641
        %646 = vst.msk [vmem:[%s217] sm:$0xff] %vm489, %v644
        %647 = vst.msk [vmem:[%s217 + $0x8] sm:$0xff] %vm489, %v645
        %v648 = vld [vmem:[#allocation3 + $0x10] sm:$0xf]
        %vm649 = vcmask 519168
        %650 = vst.msk [vmem:[#allocation3] sm:$0xf] %vm649, %v648
        %s651 = sand.u32 %s131, 1
        %s652 = scalar_lea.sflag [#allocation5], %s651
        %s653 = sand.u32 %s131, 1
        %s654 = smul.addr %s653, 16
        %s655 = scalar_lea.vmem [#allocation4], %s654
        // Predicated region
        $region41: #{tpu_custom_call.1} parent=35 // pred_check
          %p656 = pneg %p141
        $region42: #{tpu_custom_call.1} parent=35 // pred_check_branch
          %658 = sbr.rel (%p656) target = $region44
        $region43: #{tpu_custom_call.1} parent=35 // pred_region
          %s659 = smul.u32 2, %s23
          %s661 = ssub.s32 256, 256
          %662 = vsyncadd %s652, %s661
          %s663 = smul.addr %s22, 2
          %s664 = sadd.s32 %s659, %s663
          %s665 = smul.addr %s664, 128
          %s666 = scalar_lea.hbm %s4, %s665
          %s667 = sshll.u32 %s655, 4
          %s668 = int_to_ptr.vmem [resolvable:$true] %s667
          %673 = dma.vmem_to_hbm [thread:$0]  %s668, 256, %s666, %s652, 128, 128, 8
        $region44: #{tpu_custom_call.1} parent=35 // pred_fallthru
          _
      $region36: #{tpu_custom_call.1} parent=5 // pred_fallthru
        _
      %p674 = scmp.le.s32.totalorder 2, %s13
      // Predicated region
      $region45: #{tpu_custom_call.1} parent=5 // pred_check
        %p675 = pneg %p674
      $region46: #{tpu_custom_call.1} parent=5 // pred_check_branch
        %677 = sbr.rel (%p675) target = $region48
      $region47: #{tpu_custom_call.1} parent=5 // pred_region
        %s678 = ssub.s32 %s13, 2
        // Predicated region
        $region49: #{tpu_custom_call.1} parent=47 // pred_check
          %p679 = pneg %p147
        $region50: #{tpu_custom_call.1} parent=47 // pred_check_branch
          %681 = sbr.rel (%p679) target = $region52
        $region51: #{tpu_custom_call.1} parent=47 // pred_region
          %s682 = sand.u32 %s132, 1
          %s683 = scalar_lea.sflag [#allocation5], %s682
          %s684 = sand.u32 %s132, 1
          %s685 = smul.addr %s684, 16
          %s686 = scalar_lea.vmem [#allocation4], %s685
          %687 = dma.done %s683, 256
        $region52: #{tpu_custom_call.1} parent=47 // pred_fallthru
          _
      $region48: #{tpu_custom_call.1} parent=5 // pred_fallthru
        _
    $region6: #{tpu_custom_call.1} parent=1 // loop_footer
      %s17 = sadd.s32 1, %s13
    $region7: #{tpu_custom_call.1} parent=1 // loop_footer_branch
      %12 = sbr.rel target = $region3
    $region8: #{tpu_custom_call.1} parent=1 // loop_exit
      _
    %688 = vsyncpa [#allocation5], 1
    %s689 = scalar_lea.sflag [#allocation5], 1
    %690 = vsyncpa %s689, 1

</llo_original>
